<compile_context>
chip_gen: v5e
topology: v5e:2x2
jax: 0.10.0
libtpu: 0.0.40
codegen_flags: <defaults>
</compile_context>

<pallas_src>
import functools

import jax
import jax.numpy as jnp
from jax import lax
from jax.experimental import pallas as pl
from jax.experimental.pallas import tpu as pltpu

EPS = 1e-5  # matches torch.nn.LayerNorm default


# --------------------------------------------------------------------------- #
# Helpers
# --------------------------------------------------------------------------- #
def _round_up(x, m):
    return ((x + m - 1) // m) * m


def _vmem_caps():
    """Generation-aware (budget_for_our_buffers, vmem_limit_bytes)."""
    cap = 64 * 1024 * 1024  # conservative v7x-safe fallback
    try:
        info = pltpu.get_tpu_info()
        for attr in ("vmem_capacity_bytes", "vmem_bytes", "vmem_size_bytes"):
            val = getattr(info, attr, None)
            if val:
                cap = int(val)
                break
    except Exception:
        pass
    budget = int(cap * 0.70)                      # explicit buffers we plan for
    limit = min(int(cap * 0.85), cap - 2 * 1024 * 1024)
    return budget, limit


def _pick_tn(tn_cap, n, block_rows):
    if tn_cap < 8:
        # Explicit guard (previously silently fell back to TN=8 while W alone
        # already exceeded the limit).
        raise ValueError(
            "PreNorm Pallas kernel: VMEM budget too small for even an 8-row "
            f"tile (tn_cap={tn_cap}); feature dim too large for this tiling.")
    tn = min(int(block_rows), int(tn_cap))
    # Keep >= 4 row tiles when N allows: feeds both v7x TensorCores and keeps
    # the DMA pipeline busy.
    tn = min(tn, max(8, _round_up(pl.cdiv(n, 4), 8)))
    tn = min(tn, _round_up(n, 8))
    # Snap to a friendly granularity (256 keeps the 256-wide MXU fed on
    # v6e/v7x; 8 is the f32 sublane minimum).
    for g in (256, 128, 8):
        if tn >= g:
            tn = (tn // g) * g
            break
    return max(8, int(tn))


def _layernorm_f32(x_f32, gamma_f32, beta_f32, d):
    """Row-wise LayerNorm over the first `d` (real) columns of a padded tile."""
    dp = x_f32.shape[-1]
    inv_d = jnp.float32(1.0 / d)
    mean = jnp.sum(x_f32, axis=-1, keepdims=True) * inv_d   # pad cols are zero
    centered = x_f32 - mean
    if dp != d:
        col = lax.broadcasted_iota(jnp.int32, (1, dp), 1)
        centered = jnp.where(col < d, centered, 0.0)         # exclude pad cols
    var = jnp.sum(centered * centered, axis=-1, keepdims=True) * inv_d
    inv = lax.rsqrt(var + EPS)
    return centered * inv * gamma_f32 + beta_f32


# --------------------------------------------------------------------------- #
# Kernels
# --------------------------------------------------------------------------- #
def _prenorm_kernel_resident(x_ref, gamma_ref, beta_ref, w_ref, bias_ref,
                             o_ref, *, d):
    """One (TN, Dp) row tile; W (Dp, Dp) stays resident in VMEM."""
    y = _layernorm_f32(x_ref[...].astype(jnp.float32),
                       gamma_ref[...].astype(jnp.float32),
                       beta_ref[...].astype(jnp.float32), d)
    out = jnp.dot(y.astype(jnp.bfloat16), w_ref[...],
                  preferred_element_type=jnp.float32)
    out = out + bias_ref[...].astype(jnp.float32)
    o_ref[...] = out.astype(o_ref.dtype)


def _prenorm_kernel_coltiled(x_ref, gamma_ref, beta_ref, w_ref, bias_ref,
                             o_ref, y_ref, *, d):
    """Grid (row_tile, col_tile); LayerNorm computed once per row tile into a
    bf16 scratch, then matmul against the streamed (Dp, TC) W column block."""
    @pl.when(pl.program_id(1) == 0)
    def _():
        y = _layernorm_f32(x_ref[...].astype(jnp.float32),
                           gamma_ref[...].astype(jnp.float32),
                           beta_ref[...].astype(jnp.float32), d)
        y_ref[...] = y.astype(jnp.bfloat16)

    out = jnp.dot(y_ref[...], w_ref[...], preferred_element_type=jnp.float32)
    out = out + bias_ref[...].astype(jnp.float32)
    o_ref[...] = out.astype(o_ref.dtype)


# --------------------------------------------------------------------------- #
# Host-side wrappers
# --------------------------------------------------------------------------- #
def pack_prenorm_params(gamma, beta, w, b):
    """Pad params to a lane-dense feature dim and cast W to bf16 — done ONCE."""
    d = int(w.shape[0])
    dp = _round_up(d, 128)
    pad = dp - d
    return {
        "gamma": jnp.pad(gamma.astype(jnp.float32), (0, pad)).reshape(1, dp),
        "beta": jnp.pad(beta.astype(jnp.float32), (0, pad)).reshape(1, dp),
        "w": jnp.pad(w.astype(jnp.bfloat16), ((0, pad), (0, pad))),
        "b": jnp.pad(b.astype(jnp.float32), (0, pad)).reshape(1, dp),
        "d": d,
    }


def _build_and_call(xf, gamma_p, beta_p, w_p, bias_p, *, n, d, dp, out_dtype,
                    block_rows, budget, vmem_limit, force_col_tile, col_tile,
                    single_buffer_consts):
    cbuf = 1 if single_buffer_consts else 2
    const_kw = ({"pipeline_mode": pl.Buffered(1)}
                if single_buffer_consts else {})
    xb = jnp.dtype(xf.dtype).itemsize
    ob = jnp.dtype(out_dtype).itemsize

    # ---- resident-W feasibility --------------------------------------------
    w_resident = cbuf * dp * dp * 2                 # bf16 W
    consts = cbuf * 3 * dp * 4                      # gamma / beta / bias (f32)
    # x & out double-buffered + ~4 (TN, Dp)-sized f32 compute temporaries.
    per_row_a = dp * (2 * xb + 2 * ob + 16)
    tn_cap_a = (budget - w_resident - consts) // per_row_a
    use_col_tile = force_col_tile or tn_cap_a < 64

    if not use_col_tile:
        tn = _pick_tn(tn_cap_a, n, block_rows)
        return pl.pallas_call(
            functools.partial(_prenorm_kernel_resident, d=d),
            out_shape=jax.ShapeDtypeStruct((n, dp), out_dtype),
            grid=(pl.cdiv(n, tn),),
            in_specs=[
                pl.BlockSpec((tn, dp), lambda i: (i, 0)),              # x rows
                pl.BlockSpec((1, dp), lambda i: (0, 0), **const_kw),   # gamma
                pl.BlockSpec((1, dp), lambda i: (0, 0), **const_kw),   # beta
                pl.BlockSpec((dp, dp), lambda i: (0, 0), **const_kw),  # W bf16
                pl.BlockSpec((1, dp), lambda i: (0, 0), **const_kw),   # bias
            ],
            out_specs=pl.BlockSpec((tn, dp), lambda i: (i, 0)),
            compiler_params=pltpu.CompilerParams(
                dimension_semantics=("parallel",),
                vmem_limit_bytes=vmem_limit),
        )(xf, gamma_p, beta_p, w_p, bias_p)

    # ---- column-tiled W path (W cannot stay resident) -----------------------
    if col_tile is not None:
        tc = int(col_tile)
        if dp % tc != 0:
            raise ValueError(f"col_tile={tc} must divide padded dim {dp}")
    else:
        tc = 128
        for cand in (512, 256, 128):
            if dp % cand == 0 and 2 * dp * cand * 2 <= budget // 2:
                tc = cand
                break
    fixed_b = 2 * dp * tc * 2 + cbuf * 2 * dp * 4 + 2 * tc * 4
    per_row_b = dp * (2 * xb + 2 + 12) + tc * (2 * ob + 4)
    tn_cap_b = (budget - fixed_b) // per_row_b
    tn = _pick_tn(tn_cap_b, n, block_rows)

    return pl.pallas_call(
        functools.partial(_prenorm_kernel_coltiled, d=d),
        out_shape=jax.ShapeDtypeStruct((n, dp), out_dtype),
        grid=(pl.cdiv(n, tn), dp // tc),
        in_specs=[
            pl.BlockSpec((tn, dp), lambda i, j: (i, 0)),               # x rows
            pl.BlockSpec((1, dp), lambda i, j: (0, 0), **const_kw),    # gamma
            pl.BlockSpec((1, dp), lambda i, j: (0, 0), **const_kw),    # beta
            pl.BlockSpec((dp, tc), lambda i, j: (0, j)),               # W cols
            pl.BlockSpec((1, tc), lambda i, j: (0, j)),                # bias
        ],
        out_specs=pl.BlockSpec((tn, tc), lambda i, j: (i, j)),
        scratch_shapes=[pltpu.VMEM((tn, dp), jnp.bfloat16)],           # y tile
        compiler_params=pltpu.CompilerParams(
            dimension_semantics=("parallel", "arbitrary"),
            vmem_limit_bytes=vmem_limit),
    )(xf, gamma_p, beta_p, w_p, bias_p)


def prenorm_packed(x, params, *, block_rows=512, out_dtype=None,
                   force_col_tile=False, col_tile=None):
    """x: [B, S, D]; params from pack_prenorm_params (packed once, reused)."""
    B, S, D = x.shape
    assert D == params["d"], (D, params["d"])
    dp = params["w"].shape[0]
    n = B * S
    out_dtype = jnp.dtype(out_dtype or x.dtype)

    xf = x.reshape(n, D)
    if dp != D:                       # feature-dim pad only when D % 128 != 0
        xf = jnp.pad(xf, ((0, 0), (0, dp - D)))

    budget, vmem_limit = _vmem_caps()
    kwargs = dict(n=n, d=D, dp=dp, out_dtype=out_dtype, block_rows=block_rows,
                  budget=budget, vmem_limit=vmem_limit,
                  force_col_tile=force_col_tile, col_tile=col_tile)
    try:
        out = _build_and_call(xf, params["gamma"], params["beta"],
                              params["w"], params["b"],
                              single_buffer_consts=True, **kwargs)
    except Exception:
        # pl.Buffered(1) unsupported (or its VMEM plan rejected): retry with
        # default double-buffered constants and a budget that accounts for it.
        out = _build_and_call(xf, params["gamma"], params["beta"],
                              params["w"], params["b"],
                              single_buffer_consts=False, **kwargs)

    if dp != D:
        out = out[:, :D]
    return out.reshape(B, S, D)


def prenorm(x, gamma, beta, w, b, **kwargs):
    """Convenience wrapper. For repeated calls with fixed weights, prefer
    packing once via pack_prenorm_params + prenorm_packed."""
    return prenorm_packed(x, pack_prenorm_params(gamma, beta, w, b), **kwargs)


def prenorm_ref(x, gamma, beta, w, b):
    xf = x.astype(jnp.float32)
    mean = jnp.mean(xf, axis=-1, keepdims=True)
    var = jnp.mean((xf - mean) ** 2, axis=-1, keepdims=True)
    y = (xf - mean) * lax.rsqrt(var + EPS) * gamma + beta
    return jnp.einsum("bsd,de->bse", y, w) + b


# --------------------------------------------------------------------------- #
# Demo / self-test
# --------------------------------------------------------------------------- #
if __name__ == "__main__":
    key = jax.random.PRNGKey(0)
    kx, kw, kb = jax.random.split(key, 3)

    # 1) Small shape matching the module (batch=2, seq=8, dim=32): resident-W
    #    path with feature-dim padding (32 -> 128), weights packed once.
    B, S, D = 2, 8, 32
    x = jax.random.normal(kx, (B, S, D), dtype=jnp.float32)
    gamma = jnp.ones((D,), jnp.float32)          # nn.LayerNorm default init
    beta = jnp.zeros((D,), jnp.float32)
    w = jax.random.normal(kw, (D, D), dtype=jnp.float32) * 0.02
    b = jax.random.normal(kb, (D,), dtype=jnp.float32) * 0.01

    params = pack_prenorm_params(gamma, beta, w, b)
    out = prenorm_packed(x, params)
    jax.block_until_ready(out)
    ref = prenorm_ref(x, gamma, beta, w, b)
    assert out.shape == (B, S, D)
    # bf16 MXU operands -> slightly looser tolerance than pure-f32.
    assert jnp.allclose(out, ref, atol=1e-2, rtol=5e-2)

    # 2) Resident-W path, no padding, multi-row-tile pipelined grid.
    B2, S2, D2 = 2, 128, 128
    x2 = jax.random.normal(kx, (B2, S2, D2), dtype=jnp.float32)
    g2, be2 = jnp.ones((D2,), jnp.float32), jnp.zeros((D2,), jnp.float32)
    w2 = jax.random.normal(kw, (D2, D2), dtype=jnp.float32) * 0.02
    bb2 = jax.random.normal(kb, (D2,), dtype=jnp.float32) * 0.01
    out2 = prenorm(x2, g2, be2, w2, bb2)
    jax.block_until_ready(out2)
    assert jnp.allclose(out2, prenorm_ref(x2, g2, be2, w2, bb2),
                        atol=1e-2, rtol=5e-2)

    # 3) Column-tiled W path (forced at small D for coverage) with a partial
    #    final row block (N=200 is not a multiple of the row tile).
    B3, S3, D3 = 2, 100, 256
    x3 = jax.random.normal(kx, (B3, S3, D3), dtype=jnp.float32)
    g3 = jax.random.normal(kw, (D3,), jnp.float32) * 0.1 + 1.0
    be3 = jax.random.normal(kb, (D3,), jnp.float32) * 0.1
    w3 = jax.random.normal(kw, (D3, D3), dtype=jnp.float32) * 0.02
    bb3 = jax.random.normal(kb, (D3,), dtype=jnp.float32) * 0.01
    out3 = prenorm(x3, g3, be3, w3, bb3, force_col_tile=True, col_tile=128)
    jax.block_until_ready(out3)
    assert jnp.allclose(out3, prenorm_ref(x3, g3, be3, w3, bb3),
                        atol=1e-2, rtol=5e-2)

    print("KERNEL_OK")
</pallas_src>

<mosaic_0001>
module attributes {stable_mosaic.version = 11 : i64} {
  func.func @_prenorm_kernel_resident(%arg0: i32, %arg1: memref<8x128xf32, #tpu.memory_space<vmem>>, %arg2: memref<1x128xf32, #tpu.memory_space<vmem>>, %arg3: memref<1x128xf32, #tpu.memory_space<vmem>>, %arg4: memref<128x128xbf16, #tpu.memory_space<vmem>>, %arg5: memref<1x128xf32, #tpu.memory_space<vmem>>, %arg6: memref<8x128xf32, #tpu.memory_space<vmem>>) attributes {dimension_semantics = [#tpu.dimension_semantics<parallel>], iteration_bounds = array<i64: 2>, scalar_prefetch = 0 : i64, scratch_operands = 0 : i64, tpu.core_type = #tpu.core_type<tc>, window_params = [{transform_indices = @transform_0, window_bounds = array<i64: 8, 128>}, {pipeline_mode = #tpu.pipeline_mode<synchronous>, transform_indices = @transform_1, window_bounds = array<i64: 1, 128>}, {pipeline_mode = #tpu.pipeline_mode<synchronous>, transform_indices = @transform_2, window_bounds = array<i64: 1, 128>}, {pipeline_mode = #tpu.pipeline_mode<synchronous>, transform_indices = @transform_3, window_bounds = array<i64: 128, 128>}, {pipeline_mode = #tpu.pipeline_mode<synchronous>, transform_indices = @transform_4, window_bounds = array<i64: 1, 128>}, {transform_indices = @transform_5, window_bounds = array<i64: 8, 128>}]} {
    %c0 = arith.constant 0 : index
    %c0_0 = arith.constant 0 : index
    %0 = vector.load %arg1[%c0, %c0_0] : memref<8x128xf32, #tpu.memory_space<vmem>>, vector<8x128xf32>
    %c0_1 = arith.constant 0 : index
    %c0_2 = arith.constant 0 : index
    %1 = vector.load %arg2[%c0_1, %c0_2] : memref<1x128xf32, #tpu.memory_space<vmem>>, vector<1x128xf32>
    %c0_3 = arith.constant 0 : index
    %c0_4 = arith.constant 0 : index
    %2 = vector.load %arg3[%c0_3, %c0_4] : memref<1x128xf32, #tpu.memory_space<vmem>>, vector<1x128xf32>
    %cst = arith.constant dense<0.000000e+00> : vector<8xf32>
    %3 = vector.multi_reduction <add>, %0, %cst [1] : vector<8x128xf32> to vector<8xf32>
    %4 = vector.shape_cast %3 : vector<8xf32> to vector<8x1xf32>
    %cst_5 = arith.constant 3.125000e-02 : f32
    %5 = vector.broadcast %cst_5 : f32 to vector<8x1xf32>
    %6 = arith.mulf %4, %5 : vector<8x1xf32>
    %7 = vector.broadcast %6 : vector<8x1xf32> to vector<8x128xf32>
    %8 = arith.subf %0, %7 : vector<8x128xf32>
    %9 = tpu.iota {dimensions = array<i32: 1>} : vector<1x128xi32>
    %c32_i32 = arith.constant 32 : i32
    %10 = vector.broadcast %c32_i32 : i32 to vector<1x128xi32>
    %11 = arith.cmpi slt, %9, %10 : vector<1x128xi32>
    %cst_6 = arith.constant 0.000000e+00 : f32
    %12 = vector.shape_cast %11 : vector<1x128xi1> to vector<1x128xi1>
    %13 = vector.broadcast %12 : vector<1x128xi1> to vector<8x128xi1>
    %14 = vector.broadcast %cst_6 : f32 to vector<8x128xf32>
    %15 = arith.select %13, %8, %14 : vector<8x128xi1>, vector<8x128xf32>
    %16 = arith.mulf %15, %15 : vector<8x128xf32>
    %cst_7 = arith.constant dense<0.000000e+00> : vector<8xf32>
    %17 = vector.multi_reduction <add>, %16, %cst_7 [1] : vector<8x128xf32> to vector<8xf32>
    %18 = vector.shape_cast %17 : vector<8xf32> to vector<8x1xf32>
    %cst_8 = arith.constant 3.125000e-02 : f32
    %19 = vector.broadcast %cst_8 : f32 to vector<8x1xf32>
    %20 = arith.mulf %18, %19 : vector<8x1xf32>
    %cst_9 = arith.constant 9.99999974E-6 : f32
    %21 = vector.broadcast %cst_9 : f32 to vector<8x1xf32>
    %22 = arith.addf %20, %21 : vector<8x1xf32>
    %23 = math.rsqrt %22 : vector<8x1xf32>
    %24 = vector.broadcast %23 : vector<8x1xf32> to vector<8x128xf32>
    %25 = arith.mulf %15, %24 : vector<8x128xf32>
    %26 = vector.broadcast %1 : vector<1x128xf32> to vector<8x128xf32>
    %27 = arith.mulf %25, %26 : vector<8x128xf32>
    %28 = vector.broadcast %2 : vector<1x128xf32> to vector<8x128xf32>
    %29 = arith.addf %27, %28 : vector<8x128xf32>
    %30 = arith.truncf %29 : vector<8x128xf32> to vector<8x128xbf16>
    %c0_10 = arith.constant 0 : index
    %c0_11 = arith.constant 0 : index
    %31 = vector.load %arg4[%c0_10, %c0_11] : memref<128x128xbf16, #tpu.memory_space<vmem>>, vector<128x128xbf16>
    %cst_12 = arith.constant dense<0.000000e+00> : vector<8x128xf32>
    %32 = tpu.matmul %30, %31, %cst_12 {dimension_numbers = #tpu.dot_dimension_numbers<[1], [0], [0], [1], [0, 0, 1, 1], [], []>} : vector<8x128xbf16>, vector<128x128xbf16>, vector<8x128xf32> -> vector<8x128xf32>
    %c0_13 = arith.constant 0 : index
    %c0_14 = arith.constant 0 : index
    %33 = vector.load %arg5[%c0_13, %c0_14] : memref<1x128xf32, #tpu.memory_space<vmem>>, vector<1x128xf32>
    %34 = vector.broadcast %33 : vector<1x128xf32> to vector<8x128xf32>
    %35 = arith.addf %32, %34 : vector<8x128xf32>
    %c0_15 = arith.constant 0 : index
    %c0_16 = arith.constant 0 : index
    %36 = vector.load %arg6[%c0_15, %c0_16] : memref<8x128xf32, #tpu.memory_space<vmem>>, vector<8x128xf32>
    tpu.vector_store %arg6[%c0_15, %c0_16], %35 {strides = array<i32>} : memref<8x128xf32, #tpu.memory_space<vmem>>, vector<8x128xf32>,
    return
  }
  func.func @transform_0(%arg0: i32) -> (i32, i32) {
    %c0_i32 = arith.constant 0 : i32
    %c0_i32_0 = arith.constant 0 : i32
    return %arg0, %c0_i32 : i32, i32
  }
  func.func @transform_1(%arg0: i32) -> (i32, i32) {
    %c0_i32 = arith.constant 0 : i32
    %c0_i32_0 = arith.constant 0 : i32
    %c0_i32_1 = arith.constant 0 : i32
    return %c0_i32, %c0_i32_0 : i32, i32
  }
  func.func @transform_2(%arg0: i32) -> (i32, i32) {
    %c0_i32 = arith.constant 0 : i32
    %c0_i32_0 = arith.constant 0 : i32
    %c0_i32_1 = arith.constant 0 : i32
    return %c0_i32, %c0_i32_0 : i32, i32
  }
  func.func @transform_3(%arg0: i32) -> (i32, i32) {
    %c0_i32 = arith.constant 0 : i32
    %c0_i32_0 = arith.constant 0 : i32
    %c0_i32_1 = arith.constant 0 : i32
    return %c0_i32, %c0_i32_0 : i32, i32
  }
  func.func @transform_4(%arg0: i32) -> (i32, i32) {
    %c0_i32 = arith.constant 0 : i32
    %c0_i32_0 = arith.constant 0 : i32
    %c0_i32_1 = arith.constant 0 : i32
    return %c0_i32, %c0_i32_0 : i32, i32
  }
  func.func @transform_5(%arg0: i32) -> (i32, i32) {
    %c0_i32 = arith.constant 0 : i32
    %c0_i32_0 = arith.constant 0 : i32
    return %arg0, %c0_i32 : i32, i32
  }
}

module attributes {stable_mosaic.version = 11 : i64} {
  func.func @_prenorm_kernel_resident(%arg0: i32, %arg1: memref<8x128xf32, #tpu.memory_space<vmem>>, %arg2: memref<1x128xf32, #tpu.memory_space<vmem>>, %arg3: memref<1x128xf32, #tpu.memory_space<vmem>>, %arg4: memref<128x128xbf16, #tpu.memory_space<vmem>>, %arg5: memref<1x128xf32, #tpu.memory_space<vmem>>, %arg6: memref<8x128xf32, #tpu.memory_space<vmem>>) attributes {dimension_semantics = [#tpu.dimension_semantics<parallel>], iteration_bounds = array<i64: 2>, scalar_prefetch = 0 : i64, scratch_operands = 0 : i64, tpu.core_type = #tpu.core_type<tc>, window_params = [{transform_indices = @transform_0, window_bounds = array<i64: 8, 128>}, {pipeline_mode = #tpu.pipeline_mode<synchronous>, transform_indices = @transform_1, window_bounds = array<i64: 1, 128>}, {pipeline_mode = #tpu.pipeline_mode<synchronous>, transform_indices = @transform_2, window_bounds = array<i64: 1, 128>}, {pipeline_mode = #tpu.pipeline_mode<synchronous>, transform_indices = @transform_3, window_bounds = array<i64: 128, 128>}, {pipeline_mode = #tpu.pipeline_mode<synchronous>, transform_indices = @transform_4, window_bounds = array<i64: 1, 128>}, {transform_indices = @transform_5, window_bounds = array<i64: 8, 128>}]} {
    %c0 = arith.constant 0 : index
    %c0_0 = arith.constant 0 : index
    %0 = vector.load %arg1[%c0, %c0_0] : memref<8x128xf32, #tpu.memory_space<vmem>>, vector<8x128xf32>
    %c0_1 = arith.constant 0 : index
    %c0_2 = arith.constant 0 : index
    %1 = vector.load %arg2[%c0_1, %c0_2] : memref<1x128xf32, #tpu.memory_space<vmem>>, vector<1x128xf32>
    %c0_3 = arith.constant 0 : index
    %c0_4 = arith.constant 0 : index
    %2 = vector.load %arg3[%c0_3, %c0_4] : memref<1x128xf32, #tpu.memory_space<vmem>>, vector<1x128xf32>
    %cst = arith.constant dense<0.000000e+00> : vector<8xf32>
    %3 = vector.multi_reduction <add>, %0, %cst [1] : vector<8x128xf32> to vector<8xf32>
    %4 = vector.shape_cast %3 : vector<8xf32> to vector<8x1xf32>
    %cst_5 = arith.constant 3.125000e-02 : f32
    %5 = vector.broadcast %cst_5 : f32 to vector<8x1xf32>
    %6 = arith.mulf %4, %5 : vector<8x1xf32>
    %7 = vector.broadcast %6 : vector<8x1xf32> to vector<8x128xf32>
    %8 = arith.subf %0, %7 : vector<8x128xf32>
    %9 = tpu.iota {dimensions = array<i32: 1>} : vector<1x128xi32>
    %c32_i32 = arith.constant 32 : i32
    %10 = vector.broadcast %c32_i32 : i32 to vector<1x128xi32>
    %11 = arith.cmpi slt, %9, %10 : vector<1x128xi32>
    %cst_6 = arith.constant 0.000000e+00 : f32
    %12 = vector.shape_cast %11 : vector<1x128xi1> to vector<1x128xi1>
    %13 = vector.broadcast %12 : vector<1x128xi1> to vector<8x128xi1>
    %14 = vector.broadcast %cst_6 : f32 to vector<8x128xf32>
    %15 = arith.select %13, %8, %14 : vector<8x128xi1>, vector<8x128xf32>
    %16 = arith.mulf %15, %15 : vector<8x128xf32>
    %cst_7 = arith.constant dense<0.000000e+00> : vector<8xf32>
    %17 = vector.multi_reduction <add>, %16, %cst_7 [1] : vector<8x128xf32> to vector<8xf32>
    %18 = vector.shape_cast %17 : vector<8xf32> to vector<8x1xf32>
    %cst_8 = arith.constant 3.125000e-02 : f32
    %19 = vector.broadcast %cst_8 : f32 to vector<8x1xf32>
    %20 = arith.mulf %18, %19 : vector<8x1xf32>
    %cst_9 = arith.constant 9.99999974E-6 : f32
    %21 = vector.broadcast %cst_9 : f32 to vector<8x1xf32>
    %22 = arith.addf %20, %21 : vector<8x1xf32>
    %23 = math.rsqrt %22 : vector<8x1xf32>
    %24 = vector.broadcast %23 : vector<8x1xf32> to vector<8x128xf32>
    %25 = arith.mulf %15, %24 : vector<8x128xf32>
    %26 = vector.broadcast %1 : vector<1x128xf32> to vector<8x128xf32>
    %27 = arith.mulf %25, %26 : vector<8x128xf32>
    %28 = vector.broadcast %2 : vector<1x128xf32> to vector<8x128xf32>
    %29 = arith.addf %27, %28 : vector<8x128xf32>
    %30 = arith.truncf %29 : vector<8x128xf32> to vector<8x128xbf16>
    %c0_10 = arith.constant 0 : index
    %c0_11 = arith.constant 0 : index
    %31 = vector.load %arg4[%c0_10, %c0_11] : memref<128x128xbf16, #tpu.memory_space<vmem>>, vector<128x128xbf16>
    %cst_12 = arith.constant dense<0.000000e+00> : vector<8x128xf32>
    %32 = tpu.matmul %30, %31, %cst_12 {dimension_numbers = #tpu.dot_dimension_numbers<[1], [0], [0], [1], [0, 0, 1, 1], [], []>} : vector<8x128xbf16>, vector<128x128xbf16>, vector<8x128xf32> -> vector<8x128xf32>
    %c0_13 = arith.constant 0 : index
    %c0_14 = arith.constant 0 : index
    %33 = vector.load %arg5[%c0_13, %c0_14] : memref<1x128xf32, #tpu.memory_space<vmem>>, vector<1x128xf32>
    %34 = vector.broadcast %33 : vector<1x128xf32> to vector<8x128xf32>
    %35 = arith.addf %32, %34 : vector<8x128xf32>
    %c0_15 = arith.constant 0 : index
    %c0_16 = arith.constant 0 : index
    %36 = vector.load %arg6[%c0_15, %c0_16] : memref<8x128xf32, #tpu.memory_space<vmem>>, vector<8x128xf32>
    tpu.vector_store %arg6[%c0_15, %c0_16], %35 {strides = array<i32>} : memref<8x128xf32, #tpu.memory_space<vmem>>, vector<8x128xf32>,
    return
  }
  func.func @transform_0(%arg0: i32) -> (i32, i32) {
    %c0_i32 = arith.constant 0 : i32
    %c0_i32_0 = arith.constant 0 : i32
    return %arg0, %c0_i32 : i32, i32
  }
  func.func @transform_1(%arg0: i32) -> (i32, i32) {
    %c0_i32 = arith.constant 0 : i32
    %c0_i32_0 = arith.constant 0 : i32
    %c0_i32_1 = arith.constant 0 : i32
    return %c0_i32, %c0_i32_0 : i32, i32
  }
  func.func @transform_2(%arg0: i32) -> (i32, i32) {
    %c0_i32 = arith.constant 0 : i32
    %c0_i32_0 = arith.constant 0 : i32
    %c0_i32_1 = arith.constant 0 : i32
    return %c0_i32, %c0_i32_0 : i32, i32
  }
  func.func @transform_3(%arg0: i32) -> (i32, i32) {
    %c0_i32 = arith.constant 0 : i32
    %c0_i32_0 = arith.constant 0 : i32
    %c0_i32_1 = arith.constant 0 : i32
    return %c0_i32, %c0_i32_0 : i32, i32
  }
  func.func @transform_4(%arg0: i32) -> (i32, i32) {
    %c0_i32 = arith.constant 0 : i32
    %c0_i32_0 = arith.constant 0 : i32
    %c0_i32_1 = arith.constant 0 : i32
    return %c0_i32, %c0_i32_0 : i32, i32
  }
  func.func @transform_5(%arg0: i32) -> (i32, i32) {
    %c0_i32 = arith.constant 0 : i32
    %c0_i32_0 = arith.constant 0 : i32
    return %arg0, %c0_i32 : i32, i32
  }
}

</mosaic_0001>

<llo_original>
// kernel: tpu_custom_call.1
$region0: #{tpu_custom_call.1}
  #allocation0 [shape = 'u32[]', space=smem, size = 0x4, offset = 0x4, fixed_abs, tag = 'smem constant byte address 0x4 - core index']
  #allocation1 [shape = 'u32[72,128]{1,0:T(1,128)}', space=vmem, size = 0x9000, scoped, tag = 'internal scratch']
  %s0 = inlined_call_operand.hbm [shape: f32[16,128], index: 0, kind: input, shape index: {}]
  %s1 = inlined_call_operand.hbm [shape: f32[1,128], index: 1, kind: input, shape index: {}]
  %s2 = inlined_call_operand.vmem [shape: f32[1,128], index: 2, kind: input, shape index: {}]
  %s3 = inlined_call_operand.hbm [shape: bf16[128,128], index: 3, kind: input, shape index: {}]
  %s4 = inlined_call_operand.vmem [shape: f32[1,128], index: 4, kind: input, shape index: {}]
  %s5 = inlined_call_operand.hbm [shape: f32[16,128], index: 5, kind: output, shape index: {}]
  %s6 = sld [smem:[#allocation0]]
  $region65: #{tpu_custom_call.1} parent=0
    _
  %s8 = ssub.s32 1, %s6
  %s9 = scalar_select 0, %s8, %s6
  $region1: #{tpu_custom_call.1} parent=0
    #allocation2 [shape = 'u8[8192]{0}', space=vmem, size = 0x2000, scoped, tag = 'input window, operand 0']
    #allocation3 [shape = 's32[2]{0}', space=sflag, size = 0x8, scoped, tag = 'scoped memory for tpu_custom_call.1']
    #allocation4 [shape = 's32[2]{0}', space=sflag, size = 0x8, scoped, tag = 'scoped memory for tpu_custom_call.1']
    #allocation5 [shape = 'u8[512]{0}', space=vmem, size = 0x400, scoped, tag = 'input window, operand 1, single buffered']
    #allocation6 [shape = 's32[1]{0}', space=sflag, size = 0x4, scoped, tag = 'scoped memory for tpu_custom_call.1']
    #allocation7 [shape = 'u8[32768]{0}', space=vmem, size = 0x8000, scoped, tag = 'input window, operand 3, single buffered']
    #allocation8 [shape = 'u8[8192]{0}', space=vmem, size = 0x2000, scoped, tag = 'output window, operand 0']
    %10 = vsyncpa [#allocation3], 0
    %s11 = scalar_lea.sflag [#allocation3], 1
    %12 = vsyncpa %s11, 0
    %13 = vsyncpa [#allocation6], 0
    %14 = vsyncpa [#allocation4], 0
    %s15 = scalar_lea.sflag [#allocation4], 1
    %16 = vsyncpa %s15, 0
    loop: start=0, step=1, limit=4
    $region2: #{tpu_custom_call.1} parent=1 // loop_pre_header
      _
    $region3: #{tpu_custom_call.1} parent=1 // loop_header
      %s18 = sphi 0, %s22
      %p19 = scmp.ge.s32.totalorder %s18, 4
      %s28 = sphi 0, %s30
      %s31 = sphi 0, %s28
      %s32 = sphi 0, %s31
      %s48 = sphi 0, %s32
      %s52 = sphi 0, %s52
      %s54 = sphi 0, %s52
      %s55 = sphi 0, %s54
      %s69 = sphi 0, %s55
      %s73 = sphi 0, %s73
      %s75 = sphi 0, %s73
      %s76 = sphi 0, %s75
      %s90 = sphi 0, %s76
      %s94 = sphi 0, %s94
      %s96 = sphi 0, %s94
      %s97 = sphi 0, %s96
      %s111 = sphi 0, %s97
      %s115 = sphi 0, %s115
      %s117 = sphi 0, %s115
      %s118 = sphi 0, %s117
      %s132 = sphi 0, %s118
      %s138 = sphi 0, %s140
      %s141 = sphi 0, %s138
      %s142 = sphi 0, %s141
      %s158 = sphi 0, %s142
    $region4: #{tpu_custom_call.1} parent=1 // loop_header_branch
      %21 = sbr.rel (%p19) target = $region8
    $region5: #{tpu_custom_call.1} parent=1 // loop_body
      %s23 = ssub.s32 %s18, 1
      %s24 = ssub.s32 %s18, 2
      %s25 = sadd.s32 %s18, 1
      %s26 = ssub.s32 %s18, %s25
      %p27 = scmp.eq.s32.totalorder %s26, 0
      %s29 = sadd.s32 %s28, 1
      %s30 = scalar_select %p27, %s28, %s29
      %p33 = pneg %p27
      %p34 = scmp.eq.s32.totalorder %s18, 1
      %p35 = por %p33, %p34
      %p36 = scmp.ne.s32.totalorder %s28, %s31
      %p37 = scmp.eq.s32.totalorder %s18, 0
      %p38 = por %p36, %p37
      %p39 = scmp.ne.s32.totalorder %s28, %s31
      %p40 = scmp.eq.s32.totalorder %s23, 1
      %p41 = por %p39, %p40
      %p42 = scmp.ne.s32.totalorder %s31, %s32
      %p43 = scmp.eq.s32.totalorder %s23, 0
      %p44 = por %p42, %p43
      %p45 = scmp.ne.s32.totalorder %s31, %s32
      %p46 = scmp.eq.s32.totalorder %s24, 1
      %p47 = por %p45, %p46
      %p49 = scmp.ne.s32.totalorder %s32, %s48
      %p50 = scmp.eq.s32.totalorder %s24, 0
      %p51 = por %p49, %p50
      %s53 = sadd.s32 %s52, 1
      %p56 = scmp.eq.s32.totalorder %s18, 1
      %p57 = scmp.ne.s32.totalorder %s52, %s54
      %p58 = scmp.eq.s32.totalorder %s18, 0
      %p59 = por %p57, %p58
      %p60 = scmp.ne.s32.totalorder %s52, %s54
      %p61 = scmp.eq.s32.totalorder %s23, 1
      %p62 = por %p60, %p61
      %p63 = scmp.ne.s32.totalorder %s54, %s55
      %p64 = scmp.eq.s32.totalorder %s23, 0
      %p65 = por %p63, %p64
      %p66 = scmp.ne.s32.totalorder %s54, %s55
      %p67 = scmp.eq.s32.totalorder %s24, 1
      %p68 = por %p66, %p67
      %p70 = scmp.ne.s32.totalorder %s55, %s69
      %p71 = scmp.eq.s32.totalorder %s24, 0
      %p72 = por %p70, %p71
      %s74 = sadd.s32 %s73, 1
      %p77 = scmp.eq.s32.totalorder %s18, 1
      %p78 = scmp.ne.s32.totalorder %s73, %s75
      %p79 = scmp.eq.s32.totalorder %s18, 0
      %p80 = por %p78, %p79
      %p81 = scmp.ne.s32.totalorder %s73, %s75
      %p82 = scmp.eq.s32.totalorder %s23, 1
      %p83 = por %p81, %p82
      %p84 = scmp.ne.s32.totalorder %s75, %s76
      %p85 = scmp.eq.s32.totalorder %s23, 0
      %p86 = por %p84, %p85
      %p87 = scmp.ne.s32.totalorder %s75, %s76
      %p88 = scmp.eq.s32.totalorder %s24, 1
      %p89 = por %p87, %p88
      %p91 = scmp.ne.s32.totalorder %s76, %s90
      %p92 = scmp.eq.s32.totalorder %s24, 0
      %p93 = por %p91, %p92
      %s95 = sadd.s32 %s94, 1
      %p98 = scmp.eq.s32.totalorder %s18, 1
      %p99 = scmp.ne.s32.totalorder %s94, %s96
      %p100 = scmp.eq.s32.totalorder %s18, 0
      %p101 = por %p99, %p100
      %p102 = scmp.ne.s32.totalorder %s94, %s96
      %p103 = scmp.eq.s32.totalorder %s23, 1
      %p104 = por %p102, %p103
      %p105 = scmp.ne.s32.totalorder %s96, %s97
      %p106 = scmp.eq.s32.totalorder %s23, 0
      %p107 = por %p105, %p106
      %p108 = scmp.ne.s32.totalorder %s96, %s97
      %p109 = scmp.eq.s32.totalorder %s24, 1
      %p110 = por %p108, %p109
      %p112 = scmp.ne.s32.totalorder %s97, %s111
      %p113 = scmp.eq.s32.totalorder %s24, 0
      %p114 = por %p112, %p113
      %s116 = sadd.s32 %s115, 1
      %p119 = scmp.eq.s32.totalorder %s18, 1
      %p120 = scmp.ne.s32.totalorder %s115, %s117
      %p121 = scmp.eq.s32.totalorder %s18, 0
      %p122 = por %p120, %p121
      %p123 = scmp.ne.s32.totalorder %s115, %s117
      %p124 = scmp.eq.s32.totalorder %s23, 1
      %p125 = por %p123, %p124
      %p126 = scmp.ne.s32.totalorder %s117, %s118
      %p127 = scmp.eq.s32.totalorder %s23, 0
      %p128 = por %p126, %p127
      %p129 = scmp.ne.s32.totalorder %s117, %s118
      %p130 = scmp.eq.s32.totalorder %s24, 1
      %p131 = por %p129, %p130
      %p133 = scmp.ne.s32.totalorder %s118, %s132
      %p134 = scmp.eq.s32.totalorder %s24, 0
      %p135 = por %p133, %p134
      %s136 = ssub.s32 %s18, %s25
      %p137 = scmp.eq.s32.totalorder %s136, 0
      %s139 = sadd.s32 %s138, 1
      %s140 = scalar_select %p137, %s138, %s139
      %p143 = pneg %p137
      %p144 = scmp.eq.s32.totalorder %s18, 1
      %p145 = por %p143, %p144
      %p146 = scmp.ne.s32.totalorder %s138, %s141
      %p147 = scmp.eq.s32.totalorder %s18, 0
      %p148 = por %p146, %p147
      %p149 = scmp.ne.s32.totalorder %s138, %s141
      %p150 = scmp.eq.s32.totalorder %s23, 1
      %p151 = por %p149, %p150
      %p152 = scmp.ne.s32.totalorder %s141, %s142
      %p153 = scmp.eq.s32.totalorder %s23, 0
      %p154 = por %p152, %p153
      %p155 = scmp.ne.s32.totalorder %s141, %s142
      %p156 = scmp.eq.s32.totalorder %s24, 1
      %p157 = por %p155, %p156
      %p159 = scmp.ne.s32.totalorder %s142, %s158
      %p160 = scmp.eq.s32.totalorder %s24, 0
      %p161 = por %p159, %p160
      %p162 = scmp.le.s32.totalorder 1, %s18
      %p163 = scmp.lt.s32.totalorder %s18, 3
      %p164 = pnand %p162, %p163
      %p165 = pneg %p164
      // Predicated region
      $region9: #{tpu_custom_call.1} parent=5 // pred_check
        _
      $region10: #{tpu_custom_call.1} parent=5 // pred_check_branch
        %167 = sbr.rel (%p164) target = $region12
      $region11: #{tpu_custom_call.1} parent=5 // pred_region
        %s168 = ssub.s32 %s18, 1
        // Predicated region
        $region13: #{tpu_custom_call.1} parent=11 // pred_check
          %p169 = pneg %p65
        $region14: #{tpu_custom_call.1} parent=11 // pred_check_branch
          %171 = sbr.rel (%p169) target = $region16
        $region15: #{tpu_custom_call.1} parent=11 // pred_region
          %173 = vsyncadd [#allocation6], 0
          %s175 = sshll.u32 %s1, 4
          %s176 = int_to_ptr.hbm [resolvable:$true] %s175
          %s177 = sshll.u32 [#allocation5], 4
          %s178 = int_to_ptr.vmem [resolvable:$true] %s177
          %180 = dma.hbm_to_vmem [thread:$0]  %s176, 16, %s178, [#allocation6]
        $region16: #{tpu_custom_call.1} parent=11 // pred_fallthru
          _
        // Predicated region
        $region17: #{tpu_custom_call.1} parent=11 // pred_check
          %p181 = pneg %p86
        $region18: #{tpu_custom_call.1} parent=11 // pred_check_branch
          %183 = sbr.rel (%p181) target = $region20
        $region19: #{tpu_custom_call.1} parent=11 // pred_region
          _
        $region20: #{tpu_custom_call.1} parent=11 // pred_fallthru
          _
        // Predicated region
        $region21: #{tpu_custom_call.1} parent=11 // pred_check
          %p184 = pneg %p107
        $region22: #{tpu_custom_call.1} parent=11 // pred_check_branch
          %186 = sbr.rel (%p184) target = $region24
        $region23: #{tpu_custom_call.1} parent=11 // pred_region
          %188 = vsyncadd [#allocation6], 0
          %s189 = sshll.u32 %s3, 4
          %s190 = int_to_ptr.hbm [resolvable:$true] %s189
          %s191 = sshll.u32 [#allocation7], 4
          %s192 = int_to_ptr.vmem [resolvable:$true] %s191
          %197 = dma.hbm_to_vmem [thread:$0]  %s190, 1024, %s192, [#allocation6], 64, 64, 4
        $region24: #{tpu_custom_call.1} parent=11 // pred_fallthru
          _
        // Predicated region
        $region25: #{tpu_custom_call.1} parent=11 // pred_check
          %p198 = pneg %p128
        $region26: #{tpu_custom_call.1} parent=11 // pred_check_branch
          %200 = sbr.rel (%p198) target = $region28
        $region27: #{tpu_custom_call.1} parent=11 // pred_region
          _
        $region28: #{tpu_custom_call.1} parent=11 // pred_fallthru
          _
      $region12: #{tpu_custom_call.1} parent=5 // pred_fallthru
        _
      %p201 = scmp.lt.s32.totalorder %s18, 2
      // Predicated region
      $region29: #{tpu_custom_call.1} parent=5 // pred_check
        %p202 = pneg %p201
      $region30: #{tpu_custom_call.1} parent=5 // pred_check_branch
        %204 = sbr.rel (%p202) target = $region32
      $region31: #{tpu_custom_call.1} parent=5 // pred_region
        // Predicated region
        $region33: #{tpu_custom_call.1} parent=31 // pred_check
          %p205 = pneg %p38
        $region34: #{tpu_custom_call.1} parent=31 // pred_check_branch
          %207 = sbr.rel (%p205) target = $region36
        $region35: #{tpu_custom_call.1} parent=31 // pred_region
          %s208 = sand.u32 %s28, 1
          %s209 = scalar_lea.sflag [#allocation3], %s208
          %s210 = sand.u32 %s28, 1
          %s211 = smul.addr %s210, 8
          %s212 = scalar_lea.vmem [#allocation2], %s211
          %214 = vsyncadd %s209, 0
          %s215 = smul.addr %s18, 8
          %s216 = scalar_lea.hbm %s0, %s215
          %s218 = sshll.u32 %s216, 4
          %s219 = int_to_ptr.hbm [resolvable:$true] %s218
          %s220 = sshll.u32 %s212, 4
          %s221 = int_to_ptr.vmem [resolvable:$true] %s220
          %223 = dma.hbm_to_vmem [thread:$0]  %s219, 128, %s221, %s209
        $region36: #{tpu_custom_call.1} parent=31 // pred_fallthru
          _
      $region32: #{tpu_custom_call.1} parent=5 // pred_fallthru
        _
      %p224 = scmp.le.s32.totalorder 1, %s18
      %p225 = scmp.lt.s32.totalorder %s18, 3
      %p226 = pnand %p224, %p225
      %p227 = pneg %p226
      // Predicated region
      $region37: #{tpu_custom_call.1} parent=5 // pred_check
        _
      $region38: #{tpu_custom_call.1} parent=5 // pred_check_branch
        %229 = sbr.rel (%p226) target = $region40
      $region39: #{tpu_custom_call.1} parent=5 // pred_region
        %s230 = ssub.s32 %s18, 1
        %s231 = sand.u32 %s31, 1
        %s232 = scalar_lea.sflag [#allocation3], %s231
        %s233 = sand.u32 %s31, 1
        %s234 = smul.addr %s233, 8
        %s235 = scalar_lea.vmem [#allocation2], %s234
        // Predicated region
        $region41: #{tpu_custom_call.1} parent=39 // pred_check
          %p236 = pneg %p44
        $region42: #{tpu_custom_call.1} parent=39 // pred_check_branch
          %238 = sbr.rel (%p236) target = $region44
        $region43: #{tpu_custom_call.1} parent=39 // pred_region
          %240 = dma.done %s232, 128
        $region44: #{tpu_custom_call.1} parent=39 // pred_fallthru
          _
        // Predicated region
        $region45: #{tpu_custom_call.1} parent=39 // pred_check
          %p241 = pneg %p65
        $region46: #{tpu_custom_call.1} parent=39 // pred_check_branch
          %243 = sbr.rel (%p241) target = $region48
        $region47: #{tpu_custom_call.1} parent=39 // pred_region
          %245 = dma.done [#allocation6], 16
        $region48: #{tpu_custom_call.1} parent=39 // pred_fallthru
          _
        // Predicated region
        $region49: #{tpu_custom_call.1} parent=39 // pred_check
          %p246 = pneg %p107
        $region50: #{tpu_custom_call.1} parent=39 // pred_check_branch
          %248 = sbr.rel (%p246) target = $region52
        $region51: #{tpu_custom_call.1} parent=39 // pred_region
          %250 = dma.done [#allocation6], 1024
        $region52: #{tpu_custom_call.1} parent=39 // pred_fallthru
          _
        %s251 = sand.u32 %s31, 1
        %s252 = scalar_lea.sflag [#allocation3], %s251
        %s253 = sand.u32 %s31, 1
        %s254 = smul.addr %s253, 8
        %s255 = scalar_lea.vmem [#allocation2], %s254
        %p256 = pneg %p44
        %p257 = pneg %p41
        %p258 = pneg %p65
        %p259 = pneg %p62
        %p260 = pneg %p86
        %p261 = pneg %p83
        %p262 = pneg %p107
        %p263 = pneg %p104
        %p264 = pneg %p128
        %p265 = pneg %p125
        %p266 = pneg %p154
        %p267 = pneg %p151
        %s268 = sand.u32 %s141, 1
        %s269 = scalar_lea.sflag [#allocation4], %s268
        %s270 = sand.u32 %s141, 1
        %s271 = smul.addr %s270, 8
        %s272 = scalar_lea.vmem [#allocation8], %s271
        %v273 = vld [vmem:[%s235] sm:$0xff]
        %v274 = vld [vmem:[#allocation5] sm:$0x1]
        %v275 = vld [vmem:[%s2] sm:$0x1]
        %276 = vadd.xlane.f32.xlu0 %v273
        %v277 = vpop.xlane.xlu0 %276
        %v278 = vmul.f32 %v277, 0.03125
        %v279 = vsub.f32 %v273, %v278
        %v280 = vlaneseq
        %v281 = vand.u32 %v280, 127
        %vm282 = vcmp.lt.s32.totalorder %v281, 32
        %v283 = vsel %vm282, 1, 0
        %vm284 = vcmp.eq.s32.totalorder %v283, 1
        %v285 = vsel %vm284, %v279, 0.0
        %v286 = vmul.f32 %v285, %v285
        %287 = vadd.xlane.f32.xlu0 %v286
        %v288 = vpop.xlane.xlu0 %287
        %v289 = vmul.f32 %v288, 0.03125
        %v290 = vadd.f32 %v289, 1e-05
        %v291 = vrsqrt.pop %v290
        %v292 = vmul.f32 %v291, %v290
        %v293 = vmul.f32 %v292, %v291
        %v294 = vmul.f32 0.5, %v293
        %v295 = vsub.f32 1.5, %v294
        %v296 = vmul.f32 %v291, %v295
        %vm297 = vweird.f32 %v290
        %vm298 = vweird.f32 %v291
        %vm299 = vmor %vm297, %vm298
        %v300 = vsel %vm299, %v291, %v296
        %v301 = vmul.f32 %v285, %v300
        %v303 = vperm.slane %v274, 0
        %v305 = vmul.f32 %v301, %v303
        %v307 = vperm.slane %v275, 0
        %v309 = vadd.f32 %v305, %v307
        %v310 = vpack.c.bf16 %v309, %v309
        %v311 = vld [vmem:[#allocation7] sm:$0xf]
        %v312 = vld [vmem:[#allocation7 + $0x4] sm:$0xf]
        %v313 = vld [vmem:[#allocation7 + $0x8] sm:$0xf]
        %v314 = vld [vmem:[#allocation7 + $0xc] sm:$0xf]
        %v315 = vld [vmem:[#allocation7 + $0x10] sm:$0xf]
        %v316 = vld [vmem:[#allocation7 + $0x14] sm:$0xf]
        %v317 = vld [vmem:[#allocation7 + $0x18] sm:$0xf]
        %v318 = vld [vmem:[#allocation7 + $0x1c] sm:$0xf]
        %v319 = vld [vmem:[#allocation7 + $0x20] sm:$0xf]
        %v320 = vld [vmem:[#allocation7 + $0x24] sm:$0xf]
        %v321 = vld [vmem:[#allocation7 + $0x28] sm:$0xf]
        %v322 = vld [vmem:[#allocation7 + $0x2c] sm:$0xf]
        %v323 = vld [vmem:[#allocation7 + $0x30] sm:$0xf]
        %v324 = vld [vmem:[#allocation7 + $0x34] sm:$0xf]
        %v325 = vld [vmem:[#allocation7 + $0x38] sm:$0xf]
        %v326 = vld [vmem:[#allocation7 + $0x3c] sm:$0xf]
        %v327 = vld [vmem:[%s4] sm:$0x1]
        %v329 = vperm.slane %v327, 0
        %v347 = vunpack.c.l.b16 %v311
        %v348 = vunpack.c.l.b16 %v312
        %v349 = vunpack.c.l.b16 %v313
        %v350 = vunpack.c.l.b16 %v314
        %v351 = vunpack.c.l.b16 %v315
        %v352 = vunpack.c.l.b16 %v316
        %v353 = vunpack.c.l.b16 %v317
        %v354 = vunpack.c.l.b16 %v318
        %v355 = vunpack.c.l.b16 %v319
        %v356 = vunpack.c.l.b16 %v320
        %v357 = vunpack.c.l.b16 %v321
        %v358 = vunpack.c.l.b16 %v322
        %v359 = vunpack.c.l.b16 %v323
        %v360 = vunpack.c.l.b16 %v324
        %v361 = vunpack.c.l.b16 %v325
        %v362 = vunpack.c.l.b16 %v326
        %v363 = vpack.c.b16 %v348, %v347
        %v364 = vpack.c.b16 %v350, %v349
        %v365 = vpack.c.b16 %v352, %v351
        %v366 = vpack.c.b16 %v354, %v353
        %v367 = vpack.c.b16 %v356, %v355
        %v368 = vpack.c.b16 %v358, %v357
        %v369 = vpack.c.b16 %v360, %v359
        %v370 = vpack.c.b16 %v362, %v361
        %379 = vmatpush.bf16.msra.mxu0 %v370
        %380 = vmatpush.bf16.msra.mxu0 %v369
        %381 = vmatpush.bf16.msra.mxu0 %v368
        %382 = vmatpush.bf16.msra.mxu0 %v367
        %383 = vmatpush.bf16.msra.mxu0 %v366
        %384 = vmatpush.bf16.msra.mxu0 %v365
        %385 = vmatpush.bf16.msra.mxu0 %v364
        %386 = vmatpush.bf16.msra.mxu0 %v363
        %387 = vmatmul.bf16.gmra.mxu0 %v310
        %v388 = vpop.f32.mrf.mxu0
        %v389 = vadd.f32 %v329, %v388
        %v390 = vpop.f32.mrf.mxu0
        %391 = vdwg.mxu0
        %392 = vst [vmem:[%s272] sm:$0xff] %v389
        %s393 = sand.u32 %s141, 1
        %s394 = scalar_lea.sflag [#allocation4], %s393
        %s395 = sand.u32 %s141, 1
        %s396 = smul.addr %s395, 8
        %s397 = scalar_lea.vmem [#allocation8], %s396
        // Predicated region
        $region53: #{tpu_custom_call.1} parent=39 // pred_check
          %p398 = pneg %p151
        $region54: #{tpu_custom_call.1} parent=39 // pred_check_branch
          %400 = sbr.rel (%p398) target = $region56
        $region55: #{tpu_custom_call.1} parent=39 // pred_region
          %402 = vsyncadd %s394, 0
          %s403 = smul.addr %s23, 8
          %s404 = scalar_lea.hbm %s5, %s403
          %s406 = sshll.u32 %s397, 4
          %s407 = int_to_ptr.vmem [resolvable:$true] %s406
          %s408 = sshll.u32 %s404, 4
          %s409 = int_to_ptr.hbm [resolvable:$true] %s408
          %411 = dma.vmem_to_hbm [thread:$0]  %s407, 128, %s409, %s394
        $region56: #{tpu_custom_call.1} parent=39 // pred_fallthru
          _
      $region40: #{tpu_custom_call.1} parent=5 // pred_fallthru
        _
      %p412 = scmp.le.s32.totalorder 2, %s18
      // Predicated region
      $region57: #{tpu_custom_call.1} parent=5 // pred_check
        %p413 = pneg %p412
      $region58: #{tpu_custom_call.1} parent=5 // pred_check_branch
        %415 = sbr.rel (%p413) target = $region60
      $region59: #{tpu_custom_call.1} parent=5 // pred_region
        %s416 = ssub.s32 %s18, 2
        // Predicated region
        $region61: #{tpu_custom_call.1} parent=59 // pred_check
          %p417 = pneg %p157
        $region62: #{tpu_custom_call.1} parent=59 // pred_check_branch
          %419 = sbr.rel (%p417) target = $region64
        $region63: #{tpu_custom_call.1} parent=59 // pred_region
          %s420 = sand.u32 %s142, 1
          %s421 = scalar_lea.sflag [#allocation4], %s420
          %s422 = sand.u32 %s142, 1
          %s423 = smul.addr %s422, 8
          %s424 = scalar_lea.vmem [#allocation8], %s423
          %426 = dma.done %s421, 128
        $region64: #{tpu_custom_call.1} parent=59 // pred_fallthru
          _
      $region60: #{tpu_custom_call.1} parent=5 // pred_fallthru
        _
    $region6: #{tpu_custom_call.1} parent=1 // loop_footer
      %s22 = sadd.s32 1, %s18
    $region7: #{tpu_custom_call.1} parent=1 // loop_footer_branch
      %17 = sbr.rel target = $region3
    $region8: #{tpu_custom_call.1} parent=1 // loop_exit
      _
    %427 = vsyncpa [#allocation3], 1
    %s428 = scalar_lea.sflag [#allocation3], 1
    %429 = vsyncpa %s428, 1
    %430 = vsyncpa [#allocation6], 1
    %431 = vsyncpa [#allocation4], 1
    %s432 = scalar_lea.sflag [#allocation4], 1
    %433 = vsyncpa %s432, 1

// kernel: tpu_custom_call.1
$region0: #{tpu_custom_call.1}
  #allocation0 [shape = 'u32[]', space=smem, size = 0x4, offset = 0x4, fixed_abs, tag = 'smem constant byte address 0x4 - core index']
  #allocation1 [shape = 'u32[72,128]{1,0:T(1,128)}', space=vmem, size = 0x9000, scoped, tag = 'internal scratch']
  %s0 = inlined_call_operand.hbm [shape: f32[16,128], index: 0, kind: input, shape index: {}]
  %s1 = inlined_call_operand.hbm [shape: f32[1,128], index: 1, kind: input, shape index: {}]
  %s2 = inlined_call_operand.vmem [shape: f32[1,128], index: 2, kind: input, shape index: {}]
  %s3 = inlined_call_operand.hbm [shape: bf16[128,128], index: 3, kind: input, shape index: {}]
  %s4 = inlined_call_operand.vmem [shape: f32[1,128], index: 4, kind: input, shape index: {}]
  %s5 = inlined_call_operand.hbm [shape: f32[16,128], index: 5, kind: output, shape index: {}]
  %s6 = sld [smem:[#allocation0]]
  $region65: #{tpu_custom_call.1} parent=0
    _
  %s8 = ssub.s32 1, %s6
  %s9 = scalar_select 0, %s8, %s6
  $region1: #{tpu_custom_call.1} parent=0
    #allocation2 [shape = 'u8[8192]{0}', space=vmem, size = 0x2000, scoped, tag = 'input window, operand 0']
    #allocation3 [shape = 's32[2]{0}', space=sflag, size = 0x8, scoped, tag = 'scoped memory for tpu_custom_call.1']
    #allocation4 [shape = 's32[2]{0}', space=sflag, size = 0x8, scoped, tag = 'scoped memory for tpu_custom_call.1']
    #allocation5 [shape = 'u8[512]{0}', space=vmem, size = 0x400, scoped, tag = 'input window, operand 1, single buffered']
    #allocation6 [shape = 's32[1]{0}', space=sflag, size = 0x4, scoped, tag = 'scoped memory for tpu_custom_call.1']
    #allocation7 [shape = 'u8[32768]{0}', space=vmem, size = 0x8000, scoped, tag = 'input window, operand 3, single buffered']
    #allocation8 [shape = 'u8[8192]{0}', space=vmem, size = 0x2000, scoped, tag = 'output window, operand 0']
    %10 = vsyncpa [#allocation3], 0
    %s11 = scalar_lea.sflag [#allocation3], 1
    %12 = vsyncpa %s11, 0
    %13 = vsyncpa [#allocation6], 0
    %14 = vsyncpa [#allocation4], 0
    %s15 = scalar_lea.sflag [#allocation4], 1
    %16 = vsyncpa %s15, 0
    loop: start=0, step=1, limit=4
    $region2: #{tpu_custom_call.1} parent=1 // loop_pre_header
      _
    $region3: #{tpu_custom_call.1} parent=1 // loop_header
      %s18 = sphi 0, %s22
      %p19 = scmp.ge.s32.totalorder %s18, 4
      %s28 = sphi 0, %s30
      %s31 = sphi 0, %s28
      %s32 = sphi 0, %s31
      %s48 = sphi 0, %s32
      %s52 = sphi 0, %s52
      %s54 = sphi 0, %s52
      %s55 = sphi 0, %s54
      %s69 = sphi 0, %s55
      %s73 = sphi 0, %s73
      %s75 = sphi 0, %s73
      %s76 = sphi 0, %s75
      %s90 = sphi 0, %s76
      %s94 = sphi 0, %s94
      %s96 = sphi 0, %s94
      %s97 = sphi 0, %s96
      %s111 = sphi 0, %s97
      %s115 = sphi 0, %s115
      %s117 = sphi 0, %s115
      %s118 = sphi 0, %s117
      %s132 = sphi 0, %s118
      %s138 = sphi 0, %s140
      %s141 = sphi 0, %s138
      %s142 = sphi 0, %s141
      %s158 = sphi 0, %s142
    $region4: #{tpu_custom_call.1} parent=1 // loop_header_branch
      %21 = sbr.rel (%p19) target = $region8
    $region5: #{tpu_custom_call.1} parent=1 // loop_body
      %s23 = ssub.s32 %s18, 1
      %s24 = ssub.s32 %s18, 2
      %s25 = sadd.s32 %s18, 1
      %s26 = ssub.s32 %s18, %s25
      %p27 = scmp.eq.s32.totalorder %s26, 0
      %s29 = sadd.s32 %s28, 1
      %s30 = scalar_select %p27, %s28, %s29
      %p33 = pneg %p27
      %p34 = scmp.eq.s32.totalorder %s18, 1
      %p35 = por %p33, %p34
      %p36 = scmp.ne.s32.totalorder %s28, %s31
      %p37 = scmp.eq.s32.totalorder %s18, 0
      %p38 = por %p36, %p37
      %p39 = scmp.ne.s32.totalorder %s28, %s31
      %p40 = scmp.eq.s32.totalorder %s23, 1
      %p41 = por %p39, %p40
      %p42 = scmp.ne.s32.totalorder %s31, %s32
      %p43 = scmp.eq.s32.totalorder %s23, 0
      %p44 = por %p42, %p43
      %p45 = scmp.ne.s32.totalorder %s31, %s32
      %p46 = scmp.eq.s32.totalorder %s24, 1
      %p47 = por %p45, %p46
      %p49 = scmp.ne.s32.totalorder %s32, %s48
      %p50 = scmp.eq.s32.totalorder %s24, 0
      %p51 = por %p49, %p50
      %s53 = sadd.s32 %s52, 1
      %p56 = scmp.eq.s32.totalorder %s18, 1
      %p57 = scmp.ne.s32.totalorder %s52, %s54
      %p58 = scmp.eq.s32.totalorder %s18, 0
      %p59 = por %p57, %p58
      %p60 = scmp.ne.s32.totalorder %s52, %s54
      %p61 = scmp.eq.s32.totalorder %s23, 1
      %p62 = por %p60, %p61
      %p63 = scmp.ne.s32.totalorder %s54, %s55
      %p64 = scmp.eq.s32.totalorder %s23, 0
      %p65 = por %p63, %p64
      %p66 = scmp.ne.s32.totalorder %s54, %s55
      %p67 = scmp.eq.s32.totalorder %s24, 1
      %p68 = por %p66, %p67
      %p70 = scmp.ne.s32.totalorder %s55, %s69
      %p71 = scmp.eq.s32.totalorder %s24, 0
      %p72 = por %p70, %p71
      %s74 = sadd.s32 %s73, 1
      %p77 = scmp.eq.s32.totalorder %s18, 1
      %p78 = scmp.ne.s32.totalorder %s73, %s75
      %p79 = scmp.eq.s32.totalorder %s18, 0
      %p80 = por %p78, %p79
      %p81 = scmp.ne.s32.totalorder %s73, %s75
      %p82 = scmp.eq.s32.totalorder %s23, 1
      %p83 = por %p81, %p82
      %p84 = scmp.ne.s32.totalorder %s75, %s76
      %p85 = scmp.eq.s32.totalorder %s23, 0
      %p86 = por %p84, %p85
      %p87 = scmp.ne.s32.totalorder %s75, %s76
      %p88 = scmp.eq.s32.totalorder %s24, 1
      %p89 = por %p87, %p88
      %p91 = scmp.ne.s32.totalorder %s76, %s90
      %p92 = scmp.eq.s32.totalorder %s24, 0
      %p93 = por %p91, %p92
      %s95 = sadd.s32 %s94, 1
      %p98 = scmp.eq.s32.totalorder %s18, 1
      %p99 = scmp.ne.s32.totalorder %s94, %s96
      %p100 = scmp.eq.s32.totalorder %s18, 0
      %p101 = por %p99, %p100
      %p102 = scmp.ne.s32.totalorder %s94, %s96
      %p103 = scmp.eq.s32.totalorder %s23, 1
      %p104 = por %p102, %p103
      %p105 = scmp.ne.s32.totalorder %s96, %s97
      %p106 = scmp.eq.s32.totalorder %s23, 0
      %p107 = por %p105, %p106
      %p108 = scmp.ne.s32.totalorder %s96, %s97
      %p109 = scmp.eq.s32.totalorder %s24, 1
      %p110 = por %p108, %p109
      %p112 = scmp.ne.s32.totalorder %s97, %s111
      %p113 = scmp.eq.s32.totalorder %s24, 0
      %p114 = por %p112, %p113
      %s116 = sadd.s32 %s115, 1
      %p119 = scmp.eq.s32.totalorder %s18, 1
      %p120 = scmp.ne.s32.totalorder %s115, %s117
      %p121 = scmp.eq.s32.totalorder %s18, 0
      %p122 = por %p120, %p121
      %p123 = scmp.ne.s32.totalorder %s115, %s117
      %p124 = scmp.eq.s32.totalorder %s23, 1
      %p125 = por %p123, %p124
      %p126 = scmp.ne.s32.totalorder %s117, %s118
      %p127 = scmp.eq.s32.totalorder %s23, 0
      %p128 = por %p126, %p127
      %p129 = scmp.ne.s32.totalorder %s117, %s118
      %p130 = scmp.eq.s32.totalorder %s24, 1
      %p131 = por %p129, %p130
      %p133 = scmp.ne.s32.totalorder %s118, %s132
      %p134 = scmp.eq.s32.totalorder %s24, 0
      %p135 = por %p133, %p134
      %s136 = ssub.s32 %s18, %s25
      %p137 = scmp.eq.s32.totalorder %s136, 0
      %s139 = sadd.s32 %s138, 1
      %s140 = scalar_select %p137, %s138, %s139
      %p143 = pneg %p137
      %p144 = scmp.eq.s32.totalorder %s18, 1
      %p145 = por %p143, %p144
      %p146 = scmp.ne.s32.totalorder %s138, %s141
      %p147 = scmp.eq.s32.totalorder %s18, 0
      %p148 = por %p146, %p147
      %p149 = scmp.ne.s32.totalorder %s138, %s141
      %p150 = scmp.eq.s32.totalorder %s23, 1
      %p151 = por %p149, %p150
      %p152 = scmp.ne.s32.totalorder %s141, %s142
      %p153 = scmp.eq.s32.totalorder %s23, 0
      %p154 = por %p152, %p153
      %p155 = scmp.ne.s32.totalorder %s141, %s142
      %p156 = scmp.eq.s32.totalorder %s24, 1
      %p157 = por %p155, %p156
      %p159 = scmp.ne.s32.totalorder %s142, %s158
      %p160 = scmp.eq.s32.totalorder %s24, 0
      %p161 = por %p159, %p160
      %p162 = scmp.le.s32.totalorder 1, %s18
      %p163 = scmp.lt.s32.totalorder %s18, 3
      %p164 = pnand %p162, %p163
      %p165 = pneg %p164
      // Predicated region
      $region9: #{tpu_custom_call.1} parent=5 // pred_check
        _
      $region10: #{tpu_custom_call.1} parent=5 // pred_check_branch
        %167 = sbr.rel (%p164) target = $region12
      $region11: #{tpu_custom_call.1} parent=5 // pred_region
        %s168 = ssub.s32 %s18, 1
        // Predicated region
        $region13: #{tpu_custom_call.1} parent=11 // pred_check
          %p169 = pneg %p65
        $region14: #{tpu_custom_call.1} parent=11 // pred_check_branch
          %171 = sbr.rel (%p169) target = $region16
        $region15: #{tpu_custom_call.1} parent=11 // pred_region
          %173 = vsyncadd [#allocation6], 0
          %s175 = sshll.u32 %s1, 4
          %s176 = int_to_ptr.hbm [resolvable:$true] %s175
          %s177 = sshll.u32 [#allocation5], 4
          %s178 = int_to_ptr.vmem [resolvable:$true] %s177
          %180 = dma.hbm_to_vmem [thread:$0]  %s176, 16, %s178, [#allocation6]
        $region16: #{tpu_custom_call.1} parent=11 // pred_fallthru
          _
        // Predicated region
        $region17: #{tpu_custom_call.1} parent=11 // pred_check
          %p181 = pneg %p86
        $region18: #{tpu_custom_call.1} parent=11 // pred_check_branch
          %183 = sbr.rel (%p181) target = $region20
        $region19: #{tpu_custom_call.1} parent=11 // pred_region
          _
        $region20: #{tpu_custom_call.1} parent=11 // pred_fallthru
          _
        // Predicated region
        $region21: #{tpu_custom_call.1} parent=11 // pred_check
          %p184 = pneg %p107
        $region22: #{tpu_custom_call.1} parent=11 // pred_check_branch
          %186 = sbr.rel (%p184) target = $region24
        $region23: #{tpu_custom_call.1} parent=11 // pred_region
          %188 = vsyncadd [#allocation6], 0
          %s189 = sshll.u32 %s3, 4
          %s190 = int_to_ptr.hbm [resolvable:$true] %s189
          %s191 = sshll.u32 [#allocation7], 4
          %s192 = int_to_ptr.vmem [resolvable:$true] %s191
          %197 = dma.hbm_to_vmem [thread:$0]  %s190, 1024, %s192, [#allocation6], 64, 64, 4
        $region24: #{tpu_custom_call.1} parent=11 // pred_fallthru
          _
        // Predicated region
        $region25: #{tpu_custom_call.1} parent=11 // pred_check
          %p198 = pneg %p128
        $region26: #{tpu_custom_call.1} parent=11 // pred_check_branch
          %200 = sbr.rel (%p198) target = $region28
        $region27: #{tpu_custom_call.1} parent=11 // pred_region
          _
        $region28: #{tpu_custom_call.1} parent=11 // pred_fallthru
          _
      $region12: #{tpu_custom_call.1} parent=5 // pred_fallthru
        _
      %p201 = scmp.lt.s32.totalorder %s18, 2
      // Predicated region
      $region29: #{tpu_custom_call.1} parent=5 // pred_check
        %p202 = pneg %p201
      $region30: #{tpu_custom_call.1} parent=5 // pred_check_branch
        %204 = sbr.rel (%p202) target = $region32
      $region31: #{tpu_custom_call.1} parent=5 // pred_region
        // Predicated region
        $region33: #{tpu_custom_call.1} parent=31 // pred_check
          %p205 = pneg %p38
        $region34: #{tpu_custom_call.1} parent=31 // pred_check_branch
          %207 = sbr.rel (%p205) target = $region36
        $region35: #{tpu_custom_call.1} parent=31 // pred_region
          %s208 = sand.u32 %s28, 1
          %s209 = scalar_lea.sflag [#allocation3], %s208
          %s210 = sand.u32 %s28, 1
          %s211 = smul.addr %s210, 8
          %s212 = scalar_lea.vmem [#allocation2], %s211
          %214 = vsyncadd %s209, 0
          %s215 = smul.addr %s18, 8
          %s216 = scalar_lea.hbm %s0, %s215
          %s218 = sshll.u32 %s216, 4
          %s219 = int_to_ptr.hbm [resolvable:$true] %s218
          %s220 = sshll.u32 %s212, 4
          %s221 = int_to_ptr.vmem [resolvable:$true] %s220
          %223 = dma.hbm_to_vmem [thread:$0]  %s219, 128, %s221, %s209
        $region36: #{tpu_custom_call.1} parent=31 // pred_fallthru
          _
      $region32: #{tpu_custom_call.1} parent=5 // pred_fallthru
        _
      %p224 = scmp.le.s32.totalorder 1, %s18
      %p225 = scmp.lt.s32.totalorder %s18, 3
      %p226 = pnand %p224, %p225
      %p227 = pneg %p226
      // Predicated region
      $region37: #{tpu_custom_call.1} parent=5 // pred_check
        _
      $region38: #{tpu_custom_call.1} parent=5 // pred_check_branch
        %229 = sbr.rel (%p226) target = $region40
      $region39: #{tpu_custom_call.1} parent=5 // pred_region
        %s230 = ssub.s32 %s18, 1
        %s231 = sand.u32 %s31, 1
        %s232 = scalar_lea.sflag [#allocation3], %s231
        %s233 = sand.u32 %s31, 1
        %s234 = smul.addr %s233, 8
        %s235 = scalar_lea.vmem [#allocation2], %s234
        // Predicated region
        $region41: #{tpu_custom_call.1} parent=39 // pred_check
          %p236 = pneg %p44
        $region42: #{tpu_custom_call.1} parent=39 // pred_check_branch
          %238 = sbr.rel (%p236) target = $region44
        $region43: #{tpu_custom_call.1} parent=39 // pred_region
          %240 = dma.done %s232, 128
        $region44: #{tpu_custom_call.1} parent=39 // pred_fallthru
          _
        // Predicated region
        $region45: #{tpu_custom_call.1} parent=39 // pred_check
          %p241 = pneg %p65
        $region46: #{tpu_custom_call.1} parent=39 // pred_check_branch
          %243 = sbr.rel (%p241) target = $region48
        $region47: #{tpu_custom_call.1} parent=39 // pred_region
          %245 = dma.done [#allocation6], 16
        $region48: #{tpu_custom_call.1} parent=39 // pred_fallthru
          _
        // Predicated region
        $region49: #{tpu_custom_call.1} parent=39 // pred_check
          %p246 = pneg %p107
        $region50: #{tpu_custom_call.1} parent=39 // pred_check_branch
          %248 = sbr.rel (%p246) target = $region52
        $region51: #{tpu_custom_call.1} parent=39 // pred_region
          %250 = dma.done [#allocation6], 1024
        $region52: #{tpu_custom_call.1} parent=39 // pred_fallthru
          _
        %s251 = sand.u32 %s31, 1
        %s252 = scalar_lea.sflag [#allocation3], %s251
        %s253 = sand.u32 %s31, 1
        %s254 = smul.addr %s253, 8
        %s255 = scalar_lea.vmem [#allocation2], %s254
        %p256 = pneg %p44
        %p257 = pneg %p41
        %p258 = pneg %p65
        %p259 = pneg %p62
        %p260 = pneg %p86
        %p261 = pneg %p83
        %p262 = pneg %p107
        %p263 = pneg %p104
        %p264 = pneg %p128
        %p265 = pneg %p125
        %p266 = pneg %p154
        %p267 = pneg %p151
        %s268 = sand.u32 %s141, 1
        %s269 = scalar_lea.sflag [#allocation4], %s268
        %s270 = sand.u32 %s141, 1
        %s271 = smul.addr %s270, 8
        %s272 = scalar_lea.vmem [#allocation8], %s271
        %v273 = vld [vmem:[%s235] sm:$0xff]
        %v274 = vld [vmem:[#allocation5] sm:$0x1]
        %v275 = vld [vmem:[%s2] sm:$0x1]
        %276 = vadd.xlane.f32.xlu0 %v273
        %v277 = vpop.xlane.xlu0 %276
        %v278 = vmul.f32 %v277, 0.03125
        %v279 = vsub.f32 %v273, %v278
        %v280 = vlaneseq
        %v281 = vand.u32 %v280, 127
        %vm282 = vcmp.lt.s32.totalorder %v281, 32
        %v283 = vsel %vm282, 1, 0
        %vm284 = vcmp.eq.s32.totalorder %v283, 1
        %v285 = vsel %vm284, %v279, 0.0
        %v286 = vmul.f32 %v285, %v285
        %287 = vadd.xlane.f32.xlu0 %v286
        %v288 = vpop.xlane.xlu0 %287
        %v289 = vmul.f32 %v288, 0.03125
        %v290 = vadd.f32 %v289, 1e-05
        %v291 = vrsqrt.pop %v290
        %v292 = vmul.f32 %v291, %v290
        %v293 = vmul.f32 %v292, %v291
        %v294 = vmul.f32 0.5, %v293
        %v295 = vsub.f32 1.5, %v294
        %v296 = vmul.f32 %v291, %v295
        %vm297 = vweird.f32 %v290
        %vm298 = vweird.f32 %v291
        %vm299 = vmor %vm297, %vm298
        %v300 = vsel %vm299, %v291, %v296
        %v301 = vmul.f32 %v285, %v300
        %v303 = vperm.slane %v274, 0
        %v305 = vmul.f32 %v301, %v303
        %v307 = vperm.slane %v275, 0
        %v309 = vadd.f32 %v305, %v307
        %v310 = vpack.c.bf16 %v309, %v309
        %v311 = vld [vmem:[#allocation7] sm:$0xf]
        %v312 = vld [vmem:[#allocation7 + $0x4] sm:$0xf]
        %v313 = vld [vmem:[#allocation7 + $0x8] sm:$0xf]
        %v314 = vld [vmem:[#allocation7 + $0xc] sm:$0xf]
        %v315 = vld [vmem:[#allocation7 + $0x10] sm:$0xf]
        %v316 = vld [vmem:[#allocation7 + $0x14] sm:$0xf]
        %v317 = vld [vmem:[#allocation7 + $0x18] sm:$0xf]
        %v318 = vld [vmem:[#allocation7 + $0x1c] sm:$0xf]
        %v319 = vld [vmem:[#allocation7 + $0x20] sm:$0xf]
        %v320 = vld [vmem:[#allocation7 + $0x24] sm:$0xf]
        %v321 = vld [vmem:[#allocation7 + $0x28] sm:$0xf]
        %v322 = vld [vmem:[#allocation7 + $0x2c] sm:$0xf]
        %v323 = vld [vmem:[#allocation7 + $0x30] sm:$0xf]
        %v324 = vld [vmem:[#allocation7 + $0x34] sm:$0xf]
        %v325 = vld [vmem:[#allocation7 + $0x38] sm:$0xf]
        %v326 = vld [vmem:[#allocation7 + $0x3c] sm:$0xf]
        %v327 = vld [vmem:[%s4] sm:$0x1]
        %v329 = vperm.slane %v327, 0
        %v347 = vunpack.c.l.b16 %v311
        %v348 = vunpack.c.l.b16 %v312
        %v349 = vunpack.c.l.b16 %v313
        %v350 = vunpack.c.l.b16 %v314
        %v351 = vunpack.c.l.b16 %v315
        %v352 = vunpack.c.l.b16 %v316
        %v353 = vunpack.c.l.b16 %v317
        %v354 = vunpack.c.l.b16 %v318
        %v355 = vunpack.c.l.b16 %v319
        %v356 = vunpack.c.l.b16 %v320
        %v357 = vunpack.c.l.b16 %v321
        %v358 = vunpack.c.l.b16 %v322
        %v359 = vunpack.c.l.b16 %v323
        %v360 = vunpack.c.l.b16 %v324
        %v361 = vunpack.c.l.b16 %v325
        %v362 = vunpack.c.l.b16 %v326
        %v363 = vpack.c.b16 %v348, %v347
        %v364 = vpack.c.b16 %v350, %v349
        %v365 = vpack.c.b16 %v352, %v351
        %v366 = vpack.c.b16 %v354, %v353
        %v367 = vpack.c.b16 %v356, %v355
        %v368 = vpack.c.b16 %v358, %v357
        %v369 = vpack.c.b16 %v360, %v359
        %v370 = vpack.c.b16 %v362, %v361
        %379 = vmatpush.bf16.msra.mxu0 %v370
        %380 = vmatpush.bf16.msra.mxu0 %v369
        %381 = vmatpush.bf16.msra.mxu0 %v368
        %382 = vmatpush.bf16.msra.mxu0 %v367
        %383 = vmatpush.bf16.msra.mxu0 %v366
        %384 = vmatpush.bf16.msra.mxu0 %v365
        %385 = vmatpush.bf16.msra.mxu0 %v364
        %386 = vmatpush.bf16.msra.mxu0 %v363
        %387 = vmatmul.bf16.gmra.mxu0 %v310
        %v388 = vpop.f32.mrf.mxu0
        %v389 = vadd.f32 %v329, %v388
        %v390 = vpop.f32.mrf.mxu0
        %391 = vdwg.mxu0
        %392 = vst [vmem:[%s272] sm:$0xff] %v389
        %s393 = sand.u32 %s141, 1
        %s394 = scalar_lea.sflag [#allocation4], %s393
        %s395 = sand.u32 %s141, 1
        %s396 = smul.addr %s395, 8
        %s397 = scalar_lea.vmem [#allocation8], %s396
        // Predicated region
        $region53: #{tpu_custom_call.1} parent=39 // pred_check
          %p398 = pneg %p151
        $region54: #{tpu_custom_call.1} parent=39 // pred_check_branch
          %400 = sbr.rel (%p398) target = $region56
        $region55: #{tpu_custom_call.1} parent=39 // pred_region
          %402 = vsyncadd %s394, 0
          %s403 = smul.addr %s23, 8
          %s404 = scalar_lea.hbm %s5, %s403
          %s406 = sshll.u32 %s397, 4
          %s407 = int_to_ptr.vmem [resolvable:$true] %s406
          %s408 = sshll.u32 %s404, 4
          %s409 = int_to_ptr.hbm [resolvable:$true] %s408
          %411 = dma.vmem_to_hbm [thread:$0]  %s407, 128, %s409, %s394
        $region56: #{tpu_custom_call.1} parent=39 // pred_fallthru
          _
      $region40: #{tpu_custom_call.1} parent=5 // pred_fallthru
        _
      %p412 = scmp.le.s32.totalorder 2, %s18
      // Predicated region
      $region57: #{tpu_custom_call.1} parent=5 // pred_check
        %p413 = pneg %p412
      $region58: #{tpu_custom_call.1} parent=5 // pred_check_branch
        %415 = sbr.rel (%p413) target = $region60
      $region59: #{tpu_custom_call.1} parent=5 // pred_region
        %s416 = ssub.s32 %s18, 2
        // Predicated region
        $region61: #{tpu_custom_call.1} parent=59 // pred_check
          %p417 = pneg %p157
        $region62: #{tpu_custom_call.1} parent=59 // pred_check_branch
          %419 = sbr.rel (%p417) target = $region64
        $region63: #{tpu_custom_call.1} parent=59 // pred_region
          %s420 = sand.u32 %s142, 1
          %s421 = scalar_lea.sflag [#allocation4], %s420
          %s422 = sand.u32 %s142, 1
          %s423 = smul.addr %s422, 8
          %s424 = scalar_lea.vmem [#allocation8], %s423
          %426 = dma.done %s421, 128
        $region64: #{tpu_custom_call.1} parent=59 // pred_fallthru
          _
      $region60: #{tpu_custom_call.1} parent=5 // pred_fallthru
        _
    $region6: #{tpu_custom_call.1} parent=1 // loop_footer
      %s22 = sadd.s32 1, %s18
    $region7: #{tpu_custom_call.1} parent=1 // loop_footer_branch
      %17 = sbr.rel target = $region3
    $region8: #{tpu_custom_call.1} parent=1 // loop_exit
      _
    %427 = vsyncpa [#allocation3], 1
    %s428 = scalar_lea.sflag [#allocation3], 1
    %429 = vsyncpa %s428, 1
    %430 = vsyncpa [#allocation6], 1
    %431 = vsyncpa [#allocation4], 1
    %s432 = scalar_lea.sflag [#allocation4], 1
    %433 = vsyncpa %s432, 1

</llo_original>
